<compile_context>
chip_gen: v7x
topology: tpu7x:2x2x1
jax: 0.10.0
libtpu: 0.0.40
codegen_flags: <defaults>
</compile_context>

<pallas_src>
import functools
import numpy as np

import jax
import jax.numpy as jnp
from jax import lax
from jax.experimental import pallas as pl
from jax.experimental.pallas import tpu as pltpu


# ----------------------------------------------------------------------------
# Fused Pallas kernel: depthwise core0 conv + full TT channel mixing as one
# MXU matmul per sample.
# ----------------------------------------------------------------------------
def _tt_conv_fused_kernel(x_ref, w_ref, o_ref, *, k, Wp, span):
    """One sample block per grid step.

    x_ref : (TB, Cin, L)          flattened, zero-padded input samples
    w_ref : (Cout, k*k*Cin)       pre-contracted dense filter
                                  (row order: (dy, dx) major, channel minor)
    o_ref : (TB, Cout, span)      span = Ho_full * Wp (lane-dense, valid cols
                                  are trimmed in the wrapper)
    """
    w = w_ref[...]                                    # (Cout, k*k*Cin)
    TB = x_ref.shape[0]
    for t in range(TB):                               # small static unroll
        x = x_ref[t]                                  # (Cin, L)
        # Every shifted conv window is a contiguous lane slice of the
        # flattened input -> no relayout, just cheap lane shifts.
        pieces = [x[:, dy * Wp + dx: dy * Wp + dx + span]
                  for dy in range(k) for dx in range(k)]
        patches = jnp.concatenate(pieces, axis=0)     # (k*k*Cin, span)
        # Single MXU matmul produces the lane-dense output tile.
        o_ref[t] = jnp.dot(w, patches, preferred_element_type=jnp.float32)


# ----------------------------------------------------------------------------
# Pre-contract the TT factors into one dense conv filter (tiny tensors, XLA).
# ----------------------------------------------------------------------------
def _precompute_dense_filter(core0, cores, in_c_modes, out_c_modes, ranks):
    """Returns F with F[jo, ci, dy, dx] s.t. conv2d(X, F) == TT forward."""
    d = len(in_c_modes)
    r0 = core0.shape[0]
    Cin = int(np.prod(in_c_modes, dtype=np.int64))
    Cout = int(np.prod(out_c_modes, dtype=np.int64))

    # Chain the channel cores: A[i_multi, j_multi, r0, r_m]
    A = cores[0]                                      # (I0, J0, r0, r1)
    Iacc, Jacc = in_c_modes[0], out_c_modes[0]
    for m in range(1, d):
        # (Iacc,Jacc,r0,rm) x (Im,Jm,rm,rm1) -> (Iacc,Im,Jacc,Jm,r0,rm1)
        A = jnp.einsum('abcd,efdg->aebfcg', A, cores[m])
        Iacc *= in_c_modes[m]
        Jacc *= out_c_modes[m]
        A = A.reshape(Iacc, Jacc, r0, ranks[m + 1])
    C = A.reshape(Cin, Cout, r0)                      # ranks[d] == 1
    # Combine with the spatial core0 (r0, 1, k, k).
    F = jnp.einsum('ijs,skl->jikl', C, core0[:, 0])   # (Cout, Cin, k, k)
    return F


# ----------------------------------------------------------------------------
# TTConvEinsum forward (fused Pallas path)
# ----------------------------------------------------------------------------
def tt_conv_forward(X, core0, cores, in_c_modes, out_c_modes, ranks,
                    stride=1, padding=0):
    """X: (B, prod(in_c_modes), H, W) f32 -> (B, prod(out_c_modes), Ho, Wo)."""
    B, Cin, H, W = X.shape
    k = core0.shape[-1]
    Cout = int(np.prod(out_c_modes, dtype=np.int64))

    # ---- TT cores -> dense filter (few KB of XLA work, done once) ----
    F = _precompute_dense_filter(core0, cores, in_c_modes, out_c_modes, ranks)
    # Patch-matrix row order inside the kernel is (dy, dx) major, channel minor.
    Wmat = jnp.transpose(F, (0, 2, 3, 1)).reshape(Cout, k * k * Cin)

    # ---- pad & flatten input so each conv window is one contiguous lane slice
    Hp, Wp = H + 2 * padding, W + 2 * padding
    Ho_full, Wo_full = Hp - k + 1, Wp - k + 1         # stride-1 conv extents
    span = Ho_full * Wp                               # lane width of kernel output
    need = (k - 1) * Wp + (k - 1) + span              # max flat index touched + 1
    extra_rows = -(-max(0, need - Hp * Wp) // Wp)     # bottom zero rows to stay in-bounds
    xpad = jnp.pad(X, ((0, 0), (0, 0),
                       (padding, padding + extra_rows),
                       (padding, padding)))
    L = (Hp + extra_rows) * Wp
    xflat = xpad.reshape(B, Cin, L)                   # free reshape in HBM

    # ---- sample blocking: amortize per-grid-step overhead, keep >=2 steps
    # so v7x's two TensorCores both get work ("parallel" grid axis).
    if B >= 16:
        TB = 8
    elif B >= 4:
        TB = B // 2
    else:
        TB = 1
    nblk = pl.cdiv(B, TB)

    wide = pl.pallas_call(
        functools.partial(_tt_conv_fused_kernel, k=k, Wp=Wp, span=span),
        out_shape=jax.ShapeDtypeStruct((B, Cout, span), jnp.float32),
        grid=(nblk,),
        in_specs=[
            pl.BlockSpec((TB, Cin, L), lambda b: (b, 0, 0)),
            pl.BlockSpec((Cout, k * k * Cin), lambda b: (0, 0)),
        ],
        out_specs=pl.BlockSpec((TB, Cout, span), lambda b: (b, 0, 0)),
        compiler_params=pltpu.CompilerParams(
            dimension_semantics=("parallel",)),
    )(xflat, Wmat)

    # ---- trim the over-wide rows and apply stride (free reshape + tiny slice)
    wide = wide.reshape(B, Cout, Ho_full, Wp)
    out = wide[:, :, ::stride, 0:Wo_full:stride]
    # TODO(synk): for stride > 1, fold the subsampling into the kernel's patch
    # slices (strided pl.ds) instead of computing the full-resolution output.
    return out


# ----------------------------------------------------------------------------
# Pure-JAX reference (mirrors the PyTorch forward / einsum chain exactly)
# ----------------------------------------------------------------------------
def tt_conv_reference(X, core0, cores, in_c_modes, out_c_modes, ranks,
                      stride=1, padding=0):
    from string import ascii_lowercase as letters
    B, Cin, H, W = X.shape
    d = len(in_c_modes)
    r0 = core0.shape[0]
    tmp = X.reshape(B * Cin, 1, H, W)
    tmp = lax.conv_general_dilated(
        tmp, core0, window_strides=(stride, stride),
        padding=[(padding, padding), (padding, padding)],
        dimension_numbers=("NCHW", "OIHW", "NCHW"))
    Ho, Wo = tmp.shape[-2:]
    tmp = tmp.reshape((B,) + tuple(in_c_modes) + (r0, Ho, Wo))
    for i in range(d):
        einstr = ('B' + letters[:i] + 'I' + letters[i:d - 1] + 'SHW,IJST->' +
                  'B' + letters[:i] + 'J' + letters[i:d - 1] + 'THW')
        tmp = jnp.einsum(einstr, tmp, cores[i])
    out_c = int(np.prod(out_c_modes, dtype=np.int64))
    return tmp.reshape(B, out_c, Ho, Wo)


# ----------------------------------------------------------------------------
# Parameter init (Hrinchuk init, same formula as the PyTorch module)
# ----------------------------------------------------------------------------
def make_params(key, in_c_modes, out_c_modes, kernel_size, ranks_in):
    d = len(in_c_modes)
    ranks = list(ranks_in) + [1]
    fan_in = int(np.prod(in_c_modes)) * kernel_size ** 2
    old_var = 2.0 / fan_in
    new_std_base = old_var / float(np.prod(ranks))
    new_std_power = 0.5 / (len(ranks) + 1)
    std = float(np.power(new_std_base, new_std_power))

    keys = jax.random.split(key, d + 1)
    core0 = std * jax.random.normal(
        keys[0], (ranks[0], 1, kernel_size, kernel_size), dtype=jnp.float32)
    cores = []
    for i in range(d):
        cores.append(std * jax.random.normal(
            keys[i + 1],
            (in_c_modes[i], out_c_modes[i], ranks[i], ranks[i + 1]),
            dtype=jnp.float32))
    return core0, cores, ranks


# ----------------------------------------------------------------------------
if __name__ == "__main__":
    in_c_modes = [2, 2]     # prod -> 4 input channels
    out_c_modes = [2, 2]    # prod -> 4 output channels
    kernel_size = 3
    ranks_in = [3, 2]
    stride = 1
    padding = 1

    key = jax.random.PRNGKey(0)
    kx, kp = jax.random.split(key)
    core0, cores, ranks = make_params(kp, in_c_modes, out_c_modes,
                                      kernel_size, ranks_in)

    B, H, W = 2, 16, 16
    Cin = int(np.prod(in_c_modes))
    X = jax.random.normal(kx, (B, Cin, H, W), dtype=jnp.float32)

    out = tt_conv_forward(X, core0, cores, in_c_modes, out_c_modes, ranks,
                          stride=stride, padding=padding)
    out = jax.block_until_ready(out)

    ref = tt_conv_reference(X, core0, cores, in_c_modes, out_c_modes, ranks,
                            stride=stride, padding=padding)
    ref = jax.block_until_ready(ref)

    assert out.shape == (B, int(np.prod(out_c_modes)), H, W), out.shape
    np.testing.assert_allclose(np.asarray(out), np.asarray(ref),
                               rtol=2e-4, atol=2e-5)
    print("KERNEL_OK")
</pallas_src>

<mosaic_0001>
module attributes {stable_mosaic.version = 11 : i64} {
  func.func @_tt_conv_fused_kernel(%arg0: i32, %arg1: memref<1x4x342xf32, #tpu.memory_space<vmem>>, %arg2: memref<4x36xf32, #tpu.memory_space<vmem>>, %arg3: memref<1x4x288xf32, #tpu.memory_space<vmem>>) attributes {dimension_semantics = [#tpu.dimension_semantics<parallel>], iteration_bounds = array<i64: 2>, scalar_prefetch = 0 : i64, scratch_operands = 0 : i64, tpu.core_type = #tpu.core_type<tc>, window_params = [{transform_indices = @transform_0, window_bounds = array<i64: 1, 4, 342>}, {pipeline_mode = #tpu.pipeline_mode<synchronous>, transform_indices = @transform_1, window_bounds = array<i64: 4, 36>}, {transform_indices = @transform_2, window_bounds = array<i64: 1, 4, 288>}]} {
    %c0 = arith.constant 0 : index
    %c0_0 = arith.constant 0 : index
    %0 = vector.load %arg2[%c0, %c0_0] : memref<4x36xf32, #tpu.memory_space<vmem>>, vector<4x36xf32>
    %c0_1 = arith.constant 0 : index
    %c0_2 = arith.constant 0 : index
    %c0_3 = arith.constant 0 : index
    %1 = vector.load %arg1[%c0_1, %c0_2, %c0_3] : memref<1x4x342xf32, #tpu.memory_space<vmem>>, vector<1x4x342xf32>
    %2 = vector.shape_cast %1 : vector<1x4x342xf32> to vector<4x342xf32>
    %3 = vector.extract_strided_slice %2 {offsets = [0, 0], sizes = [4, 288], strides = [1, 1]} : vector<4x342xf32> to vector<4x288xf32>
    %4 = vector.extract_strided_slice %2 {offsets = [0, 1], sizes = [4, 288], strides = [1, 1]} : vector<4x342xf32> to vector<4x288xf32>
    %5 = vector.extract_strided_slice %2 {offsets = [0, 2], sizes = [4, 288], strides = [1, 1]} : vector<4x342xf32> to vector<4x288xf32>
    %6 = vector.extract_strided_slice %2 {offsets = [0, 18], sizes = [4, 288], strides = [1, 1]} : vector<4x342xf32> to vector<4x288xf32>
    %7 = vector.extract_strided_slice %2 {offsets = [0, 19], sizes = [4, 288], strides = [1, 1]} : vector<4x342xf32> to vector<4x288xf32>
    %8 = vector.extract_strided_slice %2 {offsets = [0, 20], sizes = [4, 288], strides = [1, 1]} : vector<4x342xf32> to vector<4x288xf32>
    %9 = vector.extract_strided_slice %2 {offsets = [0, 36], sizes = [4, 288], strides = [1, 1]} : vector<4x342xf32> to vector<4x288xf32>
    %10 = vector.extract_strided_slice %2 {offsets = [0, 37], sizes = [4, 288], strides = [1, 1]} : vector<4x342xf32> to vector<4x288xf32>
    %11 = vector.extract_strided_slice %2 {offsets = [0, 38], sizes = [4, 288], strides = [1, 1]} : vector<4x342xf32> to vector<4x288xf32>
    %12 = tpu.concatenate %3, %4, %5, %6, %7, %8, %9, %10, %11 in 0 : vector<4x288xf32>, vector<4x288xf32>, vector<4x288xf32>, vector<4x288xf32>, vector<4x288xf32>, vector<4x288xf32>, vector<4x288xf32>, vector<4x288xf32>, vector<4x288xf32> -> vector<36x288xf32>
    %cst = arith.constant dense<0.000000e+00> : vector<4x288xf32>
    %13 = tpu.matmul %0, %12, %cst {dimension_numbers = #tpu.dot_dimension_numbers<[1], [0], [0], [1], [0, 0, 1, 1], [], []>} : vector<4x36xf32>, vector<36x288xf32>, vector<4x288xf32> -> vector<4x288xf32>
    %c0_4 = arith.constant 0 : index
    %c0_5 = arith.constant 0 : index
    %c0_6 = arith.constant 0 : index
    %14 = vector.load %arg3[%c0_4, %c0_5, %c0_6] : memref<1x4x288xf32, #tpu.memory_space<vmem>>, vector<1x4x288xf32>
    %15 = vector.shape_cast %14 : vector<1x4x288xf32> to vector<4x288xf32>
    %16 = vector.shape_cast %13 : vector<4x288xf32> to vector<1x4x288xf32>
    tpu.vector_store %arg3[%c0_4, %c0_5, %c0_6], %16 {strides = array<i32>} : memref<1x4x288xf32, #tpu.memory_space<vmem>>, vector<1x4x288xf32>,
    return
  }
  func.func @transform_0(%arg0: i32) -> (i32, i32, i32) {
    %c0_i32 = arith.constant 0 : i32
    %c0_i32_0 = arith.constant 0 : i32
    %c0_i32_1 = arith.constant 0 : i32
    return %arg0, %c0_i32, %c0_i32_0 : i32, i32, i32
  }
  func.func @transform_1(%arg0: i32) -> (i32, i32) {
    %c0_i32 = arith.constant 0 : i32
    %c0_i32_0 = arith.constant 0 : i32
    %c0_i32_1 = arith.constant 0 : i32
    return %c0_i32, %c0_i32_0 : i32, i32
  }
  func.func @transform_2(%arg0: i32) -> (i32, i32, i32) {
    %c0_i32 = arith.constant 0 : i32
    %c0_i32_0 = arith.constant 0 : i32
    %c0_i32_1 = arith.constant 0 : i32
    return %arg0, %c0_i32, %c0_i32_0 : i32, i32, i32
  }
}

</mosaic_0001>

<llo_original>
// kernel: tpu_custom_call.1
$region0: #{tpu_custom_call.1}
  #allocation0 [shape = 'u32[]', space=smem, size = 0x4, offset = 0x4, fixed_abs, tag = 'smem constant byte address 0x4 - core index']
  #allocation1 [shape = 'u32[144,128]{1,0:T(1,128)}', space=vmem, size = 0x12000, scoped, tag = 'internal scratch']
  %s0 = inlined_call_operand.hbm [shape: f32[2,4,342], index: 0, kind: input, shape index: {}]
  %s1 = inlined_call_operand.hbm [shape: f32[4,36], index: 1, kind: input, shape index: {}]
  %s2 = inlined_call_operand.hbm [shape: f32[2,4,288], index: 2, kind: output, shape index: {}]
  %s3 = sld [smem:[#allocation0]]
  $region49: #{tpu_custom_call.1} parent=0
    _
  %s5 = ssub.s32 1, %s3
  %s6 = scalar_select 0, %s5, %s3
  $region1: #{tpu_custom_call.1} parent=0
    #allocation2 [shape = 'u8[12288]{0}', space=vmem, size = 0x3000, scoped, tag = 'input window, operand 0']
    #allocation3 [shape = 's32[2]{0}', space=sflag, size = 0x8, scoped, tag = 'scoped memory for tpu_custom_call.1']
    #allocation4 [shape = 's32[2]{0}', space=sflag, size = 0x8, scoped, tag = 'scoped memory for tpu_custom_call.1']
    #allocation5 [shape = 'u8[2048]{0}', space=vmem, size = 0x800, scoped, tag = 'input window, operand 1, single buffered']
    #allocation6 [shape = 's32[1]{0}', space=sflag, size = 0x4, scoped, tag = 'scoped memory for tpu_custom_call.1']
    #allocation7 [shape = 'u8[12288]{0}', space=vmem, size = 0x3000, scoped, tag = 'output window, operand 0']
    %7 = vsyncpa [#allocation3], 0
    %s8 = scalar_lea.sflag [#allocation3], 1
    %9 = vsyncpa %s8, 0
    %10 = vsyncpa [#allocation6], 0
    %11 = vsyncpa [#allocation4], 0
    %s12 = scalar_lea.sflag [#allocation4], 1
    %13 = vsyncpa %s12, 0
    loop: start=0, step=1, limit=4
    $region2: #{tpu_custom_call.1} parent=1 // loop_pre_header
      _
    $region3: #{tpu_custom_call.1} parent=1 // loop_header
      %s15 = sphi 0, %s19
      %p16 = scmp.ge.s32.totalorder %s15, 4
      %s25 = sphi 0, %s27
      %s28 = sphi 0, %s25
      %s29 = sphi 0, %s28
      %s45 = sphi 0, %s29
      %s49 = sphi 0, %s49
      %s51 = sphi 0, %s49
      %s52 = sphi 0, %s51
      %s66 = sphi 0, %s52
      %s72 = sphi 0, %s74
      %s75 = sphi 0, %s72
      %s76 = sphi 0, %s75
      %s92 = sphi 0, %s76
    $region4: #{tpu_custom_call.1} parent=1 // loop_header_branch
      %18 = sbr.rel (%p16) target = $region8
    $region5: #{tpu_custom_call.1} parent=1 // loop_body
      %s20 = ssub.s32 %s15, 1
      %s21 = ssub.s32 %s15, 2
      %s22 = sadd.s32 %s15, 1
      %s23 = ssub.s32 %s15, %s22
      %p24 = scmp.eq.s32.totalorder %s23, 0
      %s26 = sadd.s32 %s25, 1
      %s27 = scalar_select %p24, %s25, %s26
      %p30 = pneg %p24
      %p31 = scmp.eq.s32.totalorder %s15, 1
      %p32 = por %p30, %p31
      %p33 = scmp.ne.s32.totalorder %s25, %s28
      %p34 = scmp.eq.s32.totalorder %s15, 0
      %p35 = por %p33, %p34
      %p36 = scmp.ne.s32.totalorder %s25, %s28
      %p37 = scmp.eq.s32.totalorder %s20, 1
      %p38 = por %p36, %p37
      %p39 = scmp.ne.s32.totalorder %s28, %s29
      %p40 = scmp.eq.s32.totalorder %s20, 0
      %p41 = por %p39, %p40
      %p42 = scmp.ne.s32.totalorder %s28, %s29
      %p43 = scmp.eq.s32.totalorder %s21, 1
      %p44 = por %p42, %p43
      %p46 = scmp.ne.s32.totalorder %s29, %s45
      %p47 = scmp.eq.s32.totalorder %s21, 0
      %p48 = por %p46, %p47
      %s50 = sadd.s32 %s49, 1
      %p53 = scmp.eq.s32.totalorder %s15, 1
      %p54 = scmp.ne.s32.totalorder %s49, %s51
      %p55 = scmp.eq.s32.totalorder %s15, 0
      %p56 = por %p54, %p55
      %p57 = scmp.ne.s32.totalorder %s49, %s51
      %p58 = scmp.eq.s32.totalorder %s20, 1
      %p59 = por %p57, %p58
      %p60 = scmp.ne.s32.totalorder %s51, %s52
      %p61 = scmp.eq.s32.totalorder %s20, 0
      %p62 = por %p60, %p61
      %p63 = scmp.ne.s32.totalorder %s51, %s52
      %p64 = scmp.eq.s32.totalorder %s21, 1
      %p65 = por %p63, %p64
      %p67 = scmp.ne.s32.totalorder %s52, %s66
      %p68 = scmp.eq.s32.totalorder %s21, 0
      %p69 = por %p67, %p68
      %s70 = ssub.s32 %s15, %s22
      %p71 = scmp.eq.s32.totalorder %s70, 0
      %s73 = sadd.s32 %s72, 1
      %s74 = scalar_select %p71, %s72, %s73
      %p77 = pneg %p71
      %p78 = scmp.eq.s32.totalorder %s15, 1
      %p79 = por %p77, %p78
      %p80 = scmp.ne.s32.totalorder %s72, %s75
      %p81 = scmp.eq.s32.totalorder %s15, 0
      %p82 = por %p80, %p81
      %p83 = scmp.ne.s32.totalorder %s72, %s75
      %p84 = scmp.eq.s32.totalorder %s20, 1
      %p85 = por %p83, %p84
      %p86 = scmp.ne.s32.totalorder %s75, %s76
      %p87 = scmp.eq.s32.totalorder %s20, 0
      %p88 = por %p86, %p87
      %p89 = scmp.ne.s32.totalorder %s75, %s76
      %p90 = scmp.eq.s32.totalorder %s21, 1
      %p91 = por %p89, %p90
      %p93 = scmp.ne.s32.totalorder %s76, %s92
      %p94 = scmp.eq.s32.totalorder %s21, 0
      %p95 = por %p93, %p94
      %p96 = scmp.le.s32.totalorder 1, %s15
      %p97 = scmp.lt.s32.totalorder %s15, 3
      %p98 = pnand %p96, %p97
      %p99 = pneg %p98
      // Predicated region
      $region9: #{tpu_custom_call.1} parent=5 // pred_check
        _
      $region10: #{tpu_custom_call.1} parent=5 // pred_check_branch
        %101 = sbr.rel (%p98) target = $region12
      $region11: #{tpu_custom_call.1} parent=5 // pred_region
        %s102 = ssub.s32 %s15, 1
        // Predicated region
        $region13: #{tpu_custom_call.1} parent=11 // pred_check
          %p103 = pneg %p62
        $region14: #{tpu_custom_call.1} parent=11 // pred_check_branch
          %105 = sbr.rel (%p103) target = $region16
        $region15: #{tpu_custom_call.1} parent=11 // pred_region
          %s107 = ssub.s32 64, 64
          %108 = vsyncadd [#allocation6], %s107
          %s110 = sshll.u32 [#allocation5], 4
          %s111 = int_to_ptr.vmem [resolvable:$true] %s110
          %113 = dma.hbm_to_vmem [thread:$0]  %s1, 64, %s111, [#allocation6]
        $region16: #{tpu_custom_call.1} parent=11 // pred_fallthru
          _
      $region12: #{tpu_custom_call.1} parent=5 // pred_fallthru
        _
      %p114 = scmp.lt.s32.totalorder %s15, 2
      // Predicated region
      $region17: #{tpu_custom_call.1} parent=5 // pred_check
        %p115 = pneg %p114
      $region18: #{tpu_custom_call.1} parent=5 // pred_check_branch
        %117 = sbr.rel (%p115) target = $region20
      $region19: #{tpu_custom_call.1} parent=5 // pred_region
        // Predicated region
        $region21: #{tpu_custom_call.1} parent=19 // pred_check
          %p118 = pneg %p35
        $region22: #{tpu_custom_call.1} parent=19 // pred_check_branch
          %120 = sbr.rel (%p118) target = $region24
        $region23: #{tpu_custom_call.1} parent=19 // pred_region
          %s121 = sand.u32 %s25, 1
          %s122 = scalar_lea.sflag [#allocation3], %s121
          %s123 = sand.u32 %s25, 1
          %s124 = smul.addr %s123, 12
          %s125 = scalar_lea.vmem [#allocation2], %s124
          %s127 = ssub.s32 192, 192
          %128 = vsyncadd %s122, %s127
          %s129 = smul.addr %s15, 3
          %s130 = smul.addr %s129, 64
          %s131 = scalar_lea.hbm %s0, %s130
          %s133 = sshll.u32 %s125, 4
          %s134 = int_to_ptr.vmem [resolvable:$true] %s133
          %136 = dma.hbm_to_vmem [thread:$0]  %s131, 192, %s134, %s122
        $region24: #{tpu_custom_call.1} parent=19 // pred_fallthru
          _
      $region20: #{tpu_custom_call.1} parent=5 // pred_fallthru
        _
      %p137 = scmp.le.s32.totalorder 1, %s15
      %p138 = scmp.lt.s32.totalorder %s15, 3
      %p139 = pnand %p137, %p138
      %p140 = pneg %p139
      // Predicated region
      $region25: #{tpu_custom_call.1} parent=5 // pred_check
        _
      $region26: #{tpu_custom_call.1} parent=5 // pred_check_branch
        %142 = sbr.rel (%p139) target = $region28
      $region27: #{tpu_custom_call.1} parent=5 // pred_region
        %s143 = ssub.s32 %s15, 1
        %s144 = sand.u32 %s28, 1
        %s145 = scalar_lea.sflag [#allocation3], %s144
        %s146 = sand.u32 %s28, 1
        %s147 = smul.addr %s146, 12
        %s148 = scalar_lea.vmem [#allocation2], %s147
        // Predicated region
        $region29: #{tpu_custom_call.1} parent=27 // pred_check
          %p149 = pneg %p41
        $region30: #{tpu_custom_call.1} parent=27 // pred_check_branch
          %151 = sbr.rel (%p149) target = $region32
        $region31: #{tpu_custom_call.1} parent=27 // pred_region
          %152 = dma.done %s145, 192
        $region32: #{tpu_custom_call.1} parent=27 // pred_fallthru
          _
        // Predicated region
        $region33: #{tpu_custom_call.1} parent=27 // pred_check
          %p153 = pneg %p62
        $region34: #{tpu_custom_call.1} parent=27 // pred_check_branch
          %155 = sbr.rel (%p153) target = $region36
        $region35: #{tpu_custom_call.1} parent=27 // pred_region
          %156 = dma.done [#allocation6], 64
        $region36: #{tpu_custom_call.1} parent=27 // pred_fallthru
          _
        %s157 = sand.u32 %s28, 1
        %s158 = scalar_lea.sflag [#allocation3], %s157
        %s159 = sand.u32 %s28, 1
        %s160 = smul.addr %s159, 12
        %s161 = scalar_lea.vmem [#allocation2], %s160
        %p162 = pneg %p41
        %p163 = pneg %p38
        %p164 = pneg %p62
        %p165 = pneg %p59
        %p166 = pneg %p88
        %p167 = pneg %p85
        %s168 = sand.u32 %s75, 1
        %s169 = scalar_lea.sflag [#allocation4], %s168
        %s170 = sand.u32 %s75, 1
        %s171 = smul.addr %s170, 12
        %s172 = scalar_lea.vmem [#allocation7], %s171
        %v173 = vld [vmem:[#allocation5] sm:$0xf]
        %v174 = vld [vmem:[%s148] sm:$0xff]
        %v175 = vld [vmem:[%s148 + $0x8] sm:$0xf]
        %v178 = vcombine.high %v174, %v174
        %v180 = vcombine.low %v174, %v174
        %v181 = vcombine.low %v175, %v175
        %182 = vrot.lane.b32.xlu0 %v180, 127
        %v183 = vpop.permute.xlu0 %182
        %184 = vrot.lane.b32.xlu0 %v174, 127
        %v185 = vpop.permute.xlu0 %184
        %186 = vrot.lane.b32.xlu0 %v181, 127
        %v187 = vpop.permute.xlu0 %186
        %vm188 = vcmask 1039360
        %v189 = vsel %vm188, %v183, %v185
        %v190 = vsel %vm188, %v185, %v187
        %194 = vrot.lane.b32.xlu0 %v174, 126
        %v195 = vpop.permute.xlu0 %194
        %196 = vrot.lane.b32.xlu0 %v178, 126
        %v197 = vpop.permute.xlu0 %196
        %198 = vrot.lane.b32.xlu0 %v175, 126
        %v199 = vpop.permute.xlu0 %198
        %vm200 = vcmask 1031168
        %v201 = vsel %vm200, %v195, %v197
        %v202 = vsel %vm200, %v197, %v199
        %206 = vrot.lane.b32.xlu0 %v180, 110
        %v207 = vpop.permute.xlu0 %206
        %208 = vrot.lane.b32.xlu0 %v174, 110
        %v209 = vpop.permute.xlu0 %208
        %210 = vrot.lane.b32.xlu0 %v181, 110
        %v211 = vpop.permute.xlu0 %210
        %vm212 = vcmask 900096
        %v213 = vsel %vm212, %v207, %v209
        %v214 = vsel %vm212, %v209, %v211
        %218 = vrot.lane.b32.xlu0 %v174, 109
        %v219 = vpop.permute.xlu0 %218
        %220 = vrot.lane.b32.xlu0 %v178, 109
        %v221 = vpop.permute.xlu0 %220
        %222 = vrot.lane.b32.xlu0 %v175, 109
        %v223 = vpop.permute.xlu0 %222
        %vm224 = vcmask 891904
        %v225 = vsel %vm224, %v219, %v221
        %v226 = vsel %vm224, %v221, %v223
        %230 = vrot.lane.b32.xlu0 %v180, 108
        %v231 = vpop.permute.xlu0 %230
        %232 = vrot.lane.b32.xlu0 %v174, 108
        %v233 = vpop.permute.xlu0 %232
        %234 = vrot.lane.b32.xlu0 %v181, 108
        %v235 = vpop.permute.xlu0 %234
        %vm236 = vcmask 883712
        %v237 = vsel %vm236, %v231, %v233
        %v238 = vsel %vm236, %v233, %v235
        %242 = vrot.lane.b32.xlu0 %v174, 92
        %v243 = vpop.permute.xlu0 %242
        %244 = vrot.lane.b32.xlu0 %v178, 92
        %v245 = vpop.permute.xlu0 %244
        %246 = vrot.lane.b32.xlu0 %v175, 92
        %v247 = vpop.permute.xlu0 %246
        %vm248 = vcmask 752640
        %v249 = vsel %vm248, %v243, %v245
        %v250 = vsel %vm248, %v245, %v247
        %254 = vrot.lane.b32.xlu0 %v180, 91
        %v255 = vpop.permute.xlu0 %254
        %256 = vrot.lane.b32.xlu0 %v174, 91
        %v257 = vpop.permute.xlu0 %256
        %258 = vrot.lane.b32.xlu0 %v181, 91
        %v259 = vpop.permute.xlu0 %258
        %vm260 = vcmask 744448
        %v261 = vsel %vm260, %v255, %v257
        %v262 = vsel %vm260, %v257, %v259
        %266 = vrot.lane.b32.xlu0 %v174, 90
        %v267 = vpop.permute.xlu0 %266
        %268 = vrot.lane.b32.xlu0 %v178, 90
        %v269 = vpop.permute.xlu0 %268
        %270 = vrot.lane.b32.xlu0 %v175, 90
        %v271 = vpop.permute.xlu0 %270
        %vm272 = vcmask 736256
        %v273 = vsel %vm272, %v267, %v269
        %v274 = vsel %vm272, %v269, %v271
        %vm275 = vcmask 1043456
        %v276 = vsel %vm275, %v174, %v189
        %v277 = vsel %vm275, %v178, %v190
        %v278 = vsel %vm275, %v175, %v187
        %v279 = vsel %vm275, %v201, %v213
        %v280 = vsel %vm275, %v202, %v214
        %v281 = vsel %vm275, %v199, %v211
        %v282 = vsel %vm275, %v225, %v237
        %v283 = vsel %vm275, %v226, %v238
        %v284 = vsel %vm275, %v223, %v235
        %v285 = vsel %vm275, %v249, %v261
        %v286 = vsel %vm275, %v250, %v262
        %v287 = vsel %vm275, %v247, %v259
        %vm288 = vcmask 293888
        %v290 = vsel %vm288, %v173, 0
        %v292 = vsel %vm275, %v273, 0
        %v294 = vsel %vm275, %v274, 0
        %v296 = vsel %vm275, %v271, 0
        %298 = vmatprep.subr.mxu0 %v277
        %299 = vmatpush1.msra.mxu0 %v276
        %300 = vmatprep.subr.mxu0 %v280
        %301 = vmatpush1.msra.mxu0 %v279
        %302 = vmatprep.subr.mxu0 %v283
        %303 = vmatpush1.msra.mxu0 %v282
        %304 = vmatprep.subr.mxu0 %v286
        %305 = vmatpush1.msra.mxu0 %v285
        %306 = vmatprep.subr.mxu0 %v294
        %307 = vmatpush1.msra.mxu0 %v292
        %308 = vmatprep.subr.mxu0 0.0
        %309 = vmatpush1.msra.mxu0 0.0
        %310 = vmatprep.subr.mxu0 0.0
        %311 = vmatpush1.msra.mxu0 0.0
        %312 = vmatprep.subr.mxu0 0.0
        %313 = vmatpush1.msra.mxu0 0.0
        %314 = vmatprep.subr.mxu0 0.0
        %315 = vmatpush1.msra.mxu0 0.0
        %316 = vmatprep.subr.mxu0 0.0
        %317 = vmatpush1.msra.mxu0 0.0
        %318 = vmatprep.subr.mxu0 0.0
        %319 = vmatpush1.msra.mxu0 0.0
        %320 = vmatprep.subr.mxu0 0.0
        %321 = vmatpush1.msra.mxu0 0.0
        %322 = vmatprep.subr.mxu0 0.0
        %323 = vmatpush1.msra.mxu0 0.0
        %324 = vmatprep.subr.mxu0 0.0
        %325 = vmatpush1.msra.mxu0 0.0
        %326 = vmatprep.subr.mxu0 0.0
        %327 = vmatpush1.msra.mxu0 0.0
        %328 = vmatprep.subr.mxu0 0.0
        %329 = vmatpush1.msra.mxu0 0.0
        %330 = vmatprep.subr.mxu0 0.0
        %331 = vmatpush1.msra.mxu0 0.0
        %332 = vmatprep.subr.mxu0 0.0
        %333 = vmatpush1.msra.mxu0 0.0
        %334 = vmatprep.subr.mxu0 0.0
        %335 = vmatpush1.msra.mxu0 0.0
        %336 = vmatprep.subr.mxu0 0.0
        %337 = vmatpush1.msra.mxu0 0.0
        %338 = vmatprep.subr.mxu0 0.0
        %339 = vmatpush1.msra.mxu0 0.0
        %340 = vmatprep.subr.mxu0 0.0
        %341 = vmatpush1.msra.mxu0 0.0
        %342 = vmatprep.subr.mxu0 0.0
        %343 = vmatpush1.msra.mxu0 0.0
        %344 = vmatprep.subr.mxu0 0.0
        %345 = vmatpush1.msra.mxu0 0.0
        %346 = vmatprep.subr.mxu0 0.0
        %347 = vmatpush1.msra.mxu0 0.0
        %348 = vmatprep.subr.mxu0 0.0
        %349 = vmatpush1.msra.mxu0 0.0
        %350 = vmatprep.subr.mxu0 0.0
        %351 = vmatpush1.msra.mxu0 0.0
        %352 = vmatprep.subr.mxu0 0.0
        %353 = vmatpush1.msra.mxu0 0.0
        %354 = vmatprep.subr.mxu0 0.0
        %355 = vmatpush1.msra.mxu0 0.0
        %356 = vmatprep.subr.mxu0 0.0
        %357 = vmatpush1.msra.mxu0 0.0
        %358 = vmatprep.subr.mxu0 0.0
        %359 = vmatpush1.msra.mxu0 0.0
        %360 = vmatprep.subr.mxu0 0.0
        %361 = vmatpush1.msra.mxu0 0.0
        %362 = vmatprep.mubr.f32.mxu0 0.0
        %363 = vmatmul.mubr.f32.gmra.mrb[0].mxu0 %v290
        %v364 = vpop.f32.mrb[0].mxu0
        %v365 = vadd.f32 0.0, %v364
        %v366 = vpop.f32.mrb[0].mxu0
        %v367 = vadd.f32 0.0, %v366
        %368 = vdwg.mxu0
        %369 = vmatprep.subr.mxu0 0.0
        %370 = vmatpush1.msra.mxu0 %v278
        %371 = vmatprep.subr.mxu0 0.0
        %372 = vmatpush1.msra.mxu0 %v281
        %373 = vmatprep.subr.mxu0 0.0
        %374 = vmatpush1.msra.mxu0 %v284
        %375 = vmatprep.subr.mxu0 0.0
        %376 = vmatpush1.msra.mxu0 %v287
        %377 = vmatprep.subr.mxu0 0.0
        %378 = vmatpush1.msra.mxu0 %v296
        %379 = vmatprep.subr.mxu0 0.0
        %380 = vmatpush1.msra.mxu0 0.0
        %381 = vmatprep.subr.mxu0 0.0
        %382 = vmatpush1.msra.mxu0 0.0
        %383 = vmatprep.subr.mxu0 0.0
        %384 = vmatpush1.msra.mxu0 0.0
        %385 = vmatprep.subr.mxu0 0.0
        %386 = vmatpush1.msra.mxu0 0.0
        %387 = vmatprep.subr.mxu0 0.0
        %388 = vmatpush1.msra.mxu0 0.0
        %389 = vmatprep.subr.mxu0 0.0
        %390 = vmatpush1.msra.mxu0 0.0
        %391 = vmatprep.subr.mxu0 0.0
        %392 = vmatpush1.msra.mxu0 0.0
        %393 = vmatprep.subr.mxu0 0.0
        %394 = vmatpush1.msra.mxu0 0.0
        %395 = vmatprep.subr.mxu0 0.0
        %396 = vmatpush1.msra.mxu0 0.0
        %397 = vmatprep.subr.mxu0 0.0
        %398 = vmatpush1.msra.mxu0 0.0
        %399 = vmatprep.subr.mxu0 0.0
        %400 = vmatpush1.msra.mxu0 0.0
        %401 = vmatprep.subr.mxu0 0.0
        %402 = vmatpush1.msra.mxu0 0.0
        %403 = vmatprep.subr.mxu0 0.0
        %404 = vmatpush1.msra.mxu0 0.0
        %405 = vmatprep.subr.mxu0 0.0
        %406 = vmatpush1.msra.mxu0 0.0
        %407 = vmatprep.subr.mxu0 0.0
        %408 = vmatpush1.msra.mxu0 0.0
        %409 = vmatprep.subr.mxu0 0.0
        %410 = vmatpush1.msra.mxu0 0.0
        %411 = vmatprep.subr.mxu0 0.0
        %412 = vmatpush1.msra.mxu0 0.0
        %413 = vmatprep.subr.mxu0 0.0
        %414 = vmatpush1.msra.mxu0 0.0
        %415 = vmatprep.subr.mxu0 0.0
        %416 = vmatpush1.msra.mxu0 0.0
        %417 = vmatprep.subr.mxu0 0.0
        %418 = vmatpush1.msra.mxu0 0.0
        %419 = vmatprep.subr.mxu0 0.0
        %420 = vmatpush1.msra.mxu0 0.0
        %421 = vmatprep.subr.mxu0 0.0
        %422 = vmatpush1.msra.mxu0 0.0
        %423 = vmatprep.subr.mxu0 0.0
        %424 = vmatpush1.msra.mxu0 0.0
        %425 = vmatprep.subr.mxu0 0.0
        %426 = vmatpush1.msra.mxu0 0.0
        %427 = vmatprep.subr.mxu0 0.0
        %428 = vmatpush1.msra.mxu0 0.0
        %429 = vmatprep.subr.mxu0 0.0
        %430 = vmatpush1.msra.mxu0 0.0
        %431 = vmatprep.subr.mxu0 0.0
        %432 = vmatpush1.msra.mxu0 0.0
        %433 = vmatprep.mubr.f32.mxu0 0.0
        %434 = vmatmul.mubr.f32.gmra.mrb[0].mxu0 %v290
        %v435 = vpop.f32.mrb[0].mxu0
        %v436 = vadd.f32 0.0, %v435
        %v437 = vpop.f32.mrb[0].mxu0
        %438 = vdwg.mxu0
        %v441 = vcombine.low %v365, %v367
        %443 = vst [vmem:[%s172] sm:$0xff] %v441
        %vm444 = vcmask 257024
        %445 = vst.msk [vmem:[%s172 + $0x8] sm:$0xf] %vm444, %v436
        %s446 = sand.u32 %s75, 1
        %s447 = scalar_lea.sflag [#allocation4], %s446
        %s448 = sand.u32 %s75, 1
        %s449 = smul.addr %s448, 12
        %s450 = scalar_lea.vmem [#allocation7], %s449
        // Predicated region
        $region37: #{tpu_custom_call.1} parent=27 // pred_check
          %p451 = pneg %p85
        $region38: #{tpu_custom_call.1} parent=27 // pred_check_branch
          %453 = sbr.rel (%p451) target = $region40
        $region39: #{tpu_custom_call.1} parent=27 // pred_region
          %s455 = ssub.s32 192, 192
          %456 = vsyncadd %s447, %s455
          %s457 = smul.addr %s20, 3
          %s458 = smul.addr %s457, 64
          %s459 = scalar_lea.hbm %s2, %s458
          %s461 = sshll.u32 %s450, 4
          %s462 = int_to_ptr.vmem [resolvable:$true] %s461
          %464 = dma.vmem_to_hbm [thread:$0]  %s462, 192, %s459, %s447
        $region40: #{tpu_custom_call.1} parent=27 // pred_fallthru
          _
      $region28: #{tpu_custom_call.1} parent=5 // pred_fallthru
        _
      %p465 = scmp.le.s32.totalorder 2, %s15
      // Predicated region
      $region41: #{tpu_custom_call.1} parent=5 // pred_check
        %p466 = pneg %p465
      $region42: #{tpu_custom_call.1} parent=5 // pred_check_branch
        %468 = sbr.rel (%p466) target = $region44
      $region43: #{tpu_custom_call.1} parent=5 // pred_region
        %s469 = ssub.s32 %s15, 2
        // Predicated region
        $region45: #{tpu_custom_call.1} parent=43 // pred_check
          %p470 = pneg %p91
        $region46: #{tpu_custom_call.1} parent=43 // pred_check_branch
          %472 = sbr.rel (%p470) target = $region48
        $region47: #{tpu_custom_call.1} parent=43 // pred_region
          %s473 = sand.u32 %s76, 1
          %s474 = scalar_lea.sflag [#allocation4], %s473
          %s475 = sand.u32 %s76, 1
          %s476 = smul.addr %s475, 12
          %s477 = scalar_lea.vmem [#allocation7], %s476
          %478 = dma.done %s474, 192
        $region48: #{tpu_custom_call.1} parent=43 // pred_fallthru
          _
      $region44: #{tpu_custom_call.1} parent=5 // pred_fallthru
        _
    $region6: #{tpu_custom_call.1} parent=1 // loop_footer
      %s19 = sadd.s32 1, %s15
    $region7: #{tpu_custom_call.1} parent=1 // loop_footer_branch
      %14 = sbr.rel target = $region3
    $region8: #{tpu_custom_call.1} parent=1 // loop_exit
      _
    %479 = vsyncpa [#allocation3], 1
    %s480 = scalar_lea.sflag [#allocation3], 1
    %481 = vsyncpa %s480, 1
    %482 = vsyncpa [#allocation6], 1
    %483 = vsyncpa [#allocation4], 1
    %s484 = scalar_lea.sflag [#allocation4], 1
    %485 = vsyncpa %s484, 1

</llo_original>
